<compile_context>
chip_gen: v5e
topology: v5e:2x2
jax: 0.10.0
libtpu: 0.0.40
codegen_flags: <defaults>
</compile_context>

<pallas_src>
import functools
import math

import jax
import jax.numpy as jnp
import numpy as np
from jax.experimental import pallas as pl
from jax.experimental.pallas import tpu as pltpu


# ---------------------------------------------------------------------------
# Parameter construction (deterministic, mirrors AlibiPositionalBias.__init__)
# ---------------------------------------------------------------------------
def _get_slopes(heads):
    def get_slopes_power_of_2(n):
        start = 2 ** (-(2 ** (-(math.log2(n) - 3))))
        ratio = start
        return [start * ratio ** i for i in range(n)]

    if math.log2(heads).is_integer():
        return get_slopes_power_of_2(heads)
    closest_power_of_2 = 2 ** math.floor(math.log2(heads))
    return (
        get_slopes_power_of_2(closest_power_of_2)
        + get_slopes_power_of_2(2 * closest_power_of_2)[0::2][: heads - closest_power_of_2]
    )


def make_learned_logslopes(heads):
    """nn.Parameter(log(slopes)) with slopes from _get_slopes (shape (heads, 1, 1))."""
    slopes = np.asarray(_get_slopes(heads), dtype=np.float32).reshape(heads, 1, 1)
    return jnp.asarray(np.log(slopes))


# ---------------------------------------------------------------------------
# Tiling helper: biggest tile <= target that is align-multiple and divides dim
# (full-extent block is always legal, so fall back to dim itself).
# ---------------------------------------------------------------------------
def _choose_tile(dim, target, align):
    if dim <= target:
        return dim
    t = (target // align) * align
    while t >= align:
        if dim % t == 0:
            return t
        t -= align
    return dim


# ---------------------------------------------------------------------------
# Pallas kernel
# ---------------------------------------------------------------------------
def _alibi_kernel(slopes_ref, qk_ref, out_ref, *, i_len, j_len):
    # slopes_ref: SMEM (H,) f32 (scalar-prefetched, already exp()'d)
    # qk_ref / out_ref: VMEM (ti, tj) tiles (leading b/h dims squeezed)
    h = pl.program_id(1)
    ti = pl.program_id(2)
    tj = pl.program_id(3)
    tile_i, tile_j = qk_ref.shape

    # Global positions of this tile:
    #   query row q (global) maps to i_arange value (j_len - i_len) + q
    #   key   col k (global) maps to j_arange value k
    q_idx = (
        jax.lax.broadcasted_iota(jnp.int32, (tile_i, tile_j), 0)
        + ti * tile_i
        + (j_len - i_len)
    )
    k_idx = jax.lax.broadcasted_iota(jnp.int32, (tile_i, tile_j), 1) + tj * tile_j
    bias = -jnp.abs(k_idx - q_idx).astype(jnp.float32)

    slope = slopes_ref[h]
    # Accumulate in f32, cast once at the store (matters for bf16 logits).
    out_ref[...] = (qk_ref[...].astype(jnp.float32) + bias * slope).astype(out_ref.dtype)


def learned_alibi_positional_bias(qk_dots, learned_logslopes, *, tile_i=256, tile_j=1024):
    """Forward pass of LearnedAlibiPositionalBias.

    qk_dots: (B, H, I, J)
    learned_logslopes: (heads, 1, 1) float32

    Only the H == heads path is supported.
    """
    B, H, I, J = qk_dots.shape
    heads = learned_logslopes.shape[0]
    # TODO(synk): the PyTorch module pads exp(logslopes) along dim=-2 when the qk
    # head count exceeds `heads` (an odd broadcast); only H == heads is supported.
    assert H == heads, "kernel supports qk_dots head dim == number of alibi heads"

    slopes_flat = jnp.exp(learned_logslopes).reshape(heads).astype(jnp.float32)

    ti = _choose_tile(I, tile_i, 8)     # sublane-aligned
    tj = _choose_tile(J, tile_j, 128)   # lane-dense (multiple of 128 when tiled)
    # TODO(synk): if real workloads call this with J < 128, fold I into the lane
    # axis in the wrapper to keep stores unmasked.

    grid = (B, H, I // ti, J // tj)
    kernel = functools.partial(_alibi_kernel, i_len=I, j_len=J)

    return pl.pallas_call(
        kernel,
        out_shape=jax.ShapeDtypeStruct((B, H, I, J), qk_dots.dtype),
        grid_spec=pltpu.PrefetchScalarGridSpec(
            num_scalar_prefetch=1,
            grid=grid,
            in_specs=[
                pl.BlockSpec(
                    (None, None, ti, tj),
                    lambda b, h, i, j, slopes: (b, h, i, j),
                ),
            ],
            out_specs=pl.BlockSpec(
                (None, None, ti, tj),
                lambda b, h, i, j, slopes: (b, h, i, j),
            ),
        ),
        compiler_params=pltpu.CompilerParams(
            dimension_semantics=("parallel", "parallel", "parallel", "parallel"),
        ),
        # In-place add: qk_dots is call-arg 1 (after the scalar-prefetch slopes).
        input_output_aliases={1: 0},
    )(slopes_flat, qk_dots)


# ---------------------------------------------------------------------------
# Reference (plain JAX) for verification
# ---------------------------------------------------------------------------
def _reference(qk_dots, learned_logslopes):
    B, H, I, J = qk_dots.shape
    i_arange = jnp.arange(J - I, J)
    j_arange = jnp.arange(J)
    bias = -jnp.abs(j_arange[None, None, :] - i_arange[None, :, None]).astype(jnp.float32)
    slopes = jnp.exp(learned_logslopes)  # (H, 1, 1); no pad since H == heads
    return qk_dots + bias * slopes


if __name__ == "__main__":
    key = jax.random.PRNGKey(0)
    k1, k2 = jax.random.split(key)

    # Case 1: default path — single lane-dense tile per (b, h).
    B, H, I, J = 2, 4, 8, 128
    qk_dots = jax.random.normal(k1, (B, H, I, J), dtype=jnp.float32)
    learned_logslopes = make_learned_logslopes(H)
    ref = _reference(qk_dots, learned_logslopes)
    out = jax.block_until_ready(learned_alibi_positional_bias(qk_dots, learned_logslopes))
    np.testing.assert_allclose(np.asarray(out), np.asarray(ref), rtol=1e-6, atol=1e-6)

    # Case 2: exercise the tiled path (grid over I/J tiles) at a small shape.
    B2, H2, I2, J2 = 2, 4, 16, 256
    qk2 = jax.random.normal(k2, (B2, H2, I2, J2), dtype=jnp.float32)
    logslopes2 = make_learned_logslopes(H2)
    ref2 = _reference(qk2, logslopes2)
    out2 = jax.block_until_ready(
        learned_alibi_positional_bias(qk2, logslopes2, tile_i=8, tile_j=128)
    )
    np.testing.assert_allclose(np.asarray(out2), np.asarray(ref2), rtol=1e-6, atol=1e-6)

    print("KERNEL_OK")
</pallas_src>

<mosaic_0001>
module attributes {stable_mosaic.version = 11 : i64} {
  func.func @_alibi_kernel(%arg0: i32, %arg1: i32, %arg2: i32, %arg3: i32, %arg4: memref<4xf32, #tpu.memory_space<smem>>, %arg5: memref<1x1x8x128xf32, #tpu.memory_space<vmem>>, %arg6: memref<1x1x8x128xf32, #tpu.memory_space<vmem>>) attributes {dimension_semantics = [#tpu.dimension_semantics<parallel>, #tpu.dimension_semantics<parallel>, #tpu.dimension_semantics<parallel>, #tpu.dimension_semantics<parallel>], iteration_bounds = array<i64: 2, 4, 1, 1>, scalar_prefetch = 1 : i64, scratch_operands = 0 : i64, tpu.core_type = #tpu.core_type<tc>, window_params = [{transform_indices = @transform_0, window_bounds = array<i64: 1, 1, 8, 128>}, {transform_indices = @transform_1, window_bounds = array<i64: 1, 1, 8, 128>}]} {
    %0 = tpu.iota {dimensions = array<i32: 0>} : vector<8x128xi32>
    %c8_i32 = arith.constant 8 : i32
    %1 = arith.muli %arg2, %c8_i32 : i32
    %2 = vector.broadcast %1 : i32 to vector<8x128xi32>
    %3 = arith.addi %0, %2 : vector<8x128xi32>
    %c120_i32 = arith.constant 120 : i32
    %4 = vector.broadcast %c120_i32 : i32 to vector<8x128xi32>
    %5 = arith.addi %3, %4 : vector<8x128xi32>
    %6 = tpu.iota {dimensions = array<i32: 1>} : vector<8x128xi32>
    %c128_i32 = arith.constant 128 : i32
    %7 = arith.muli %arg3, %c128_i32 : i32
    %8 = vector.broadcast %7 : i32 to vector<8x128xi32>
    %9 = arith.addi %6, %8 : vector<8x128xi32>
    %10 = arith.subi %9, %5 : vector<8x128xi32>
    %11 = math.absi %10 : vector<8x128xi32>
    %12 = arith.sitofp %11 : vector<8x128xi32> to vector<8x128xf32>
    %cst = arith.constant 0.000000e+00 : f32
    %13 = vector.broadcast %cst : f32 to vector<8x128xf32>
    %14 = arith.subf %13, %12 : vector<8x128xf32>
    %15 = arith.index_cast %arg1 : i32 to index
    %16 = memref.load %arg4[%15] : memref<4xf32, #tpu.memory_space<smem>>
    %c0 = arith.constant 0 : index
    %c0_0 = arith.constant 0 : index
    %c0_1 = arith.constant 0 : index
    %c0_2 = arith.constant 0 : index
    %17 = vector.load %arg5[%c0, %c0_0, %c0_1, %c0_2] : memref<1x1x8x128xf32, #tpu.memory_space<vmem>>, vector<1x1x8x128xf32>
    %18 = vector.shape_cast %17 : vector<1x1x8x128xf32> to vector<8x128xf32>
    %19 = vector.broadcast %16 : f32 to vector<8x128xf32>
    %20 = arith.mulf %14, %19 : vector<8x128xf32>
    %21 = arith.addf %18, %20 : vector<8x128xf32>
    %c0_3 = arith.constant 0 : index
    %c0_4 = arith.constant 0 : index
    %c0_5 = arith.constant 0 : index
    %c0_6 = arith.constant 0 : index
    %22 = vector.load %arg6[%c0_3, %c0_4, %c0_5, %c0_6] : memref<1x1x8x128xf32, #tpu.memory_space<vmem>>, vector<1x1x8x128xf32>
    %23 = vector.shape_cast %22 : vector<1x1x8x128xf32> to vector<8x128xf32>
    %24 = vector.shape_cast %21 : vector<8x128xf32> to vector<1x1x8x128xf32>
    tpu.vector_store %arg6[%c0_3, %c0_4, %c0_5, %c0_6], %24 {strides = array<i32>} : memref<1x1x8x128xf32, #tpu.memory_space<vmem>>, vector<1x1x8x128xf32>,
    return
  }
  func.func @transform_0(%arg0: i32, %arg1: i32, %arg2: i32, %arg3: i32, %arg4: memref<4xf32, #tpu.memory_space<smem>>) -> (i32, i32, i32, i32) {
    %c0_i32 = arith.constant 0 : i32
    return %arg0, %arg1, %arg2, %arg3 : i32, i32, i32, i32
  }
  func.func @transform_1(%arg0: i32, %arg1: i32, %arg2: i32, %arg3: i32, %arg4: memref<4xf32, #tpu.memory_space<smem>>) -> (i32, i32, i32, i32) {
    %c0_i32 = arith.constant 0 : i32
    return %arg0, %arg1, %arg2, %arg3 : i32, i32, i32, i32
  }
}

</mosaic_0001>

<llo_original>
// kernel: tpu_custom_call.1
$region0: #{tpu_custom_call.1}
  #allocation0 [shape = 'u32[]', space=smem, size = 0x4, offset = 0x4, fixed_abs, tag = 'smem constant byte address 0x4 - core index']
  #allocation1 [shape = 'u32[72,128]{1,0:T(1,128)}', space=vmem, size = 0x9000, scoped, tag = 'internal scratch']
  #allocation2 [shape = 's32[1]{0}', space=sflag, size = 0x4, scoped, tag = 'scoped memory for tpu_custom_call.1']
  #allocation3 [shape = 'u8[512]{0}', space=smem, size = 0x200, scoped, tag = 'prefetched SMEM operand 0']
  %s0 = inlined_call_operand.vmem [shape: f32[4], index: 0, kind: input, shape index: {}]
  %s1 = inlined_call_operand.hbm [shape: f32[2,4,8,128], index: 1, kind: input, shape index: {}, may-alias: {1,2}]
  %s2 = inlined_call_operand.hbm [shape: f32[2,4,8,128], index: 2, kind: output, shape index: {}, may-alias: {1,2}]
  %s3 = sld [smem:[#allocation0]]
  $region41: #{tpu_custom_call.1} parent=0
    _
  %s5 = ssub.s32 1, %s3
  %s6 = scalar_select 0, %s5, %s3
  %s8 = sshll.u32 %s0, 4
  %s9 = int_to_ptr.vmem [resolvable:$true] %s8
  %11 = dma.vmem_to_smem %s9, 16, [#allocation3], [#allocation2]
  %13 = dma.done [#allocation2], 16
  %14 = sfence
  $region1: #{tpu_custom_call.1} parent=0
    #allocation4 [shape = 'u8[8192]{0}', space=vmem, size = 0x2000, scoped, tag = 'input window, operand 1']
    #allocation5 [shape = 's32[2]{0}', space=sflag, size = 0x8, scoped, tag = 'scoped memory for tpu_custom_call.1']
    #allocation6 [shape = 's32[2]{0}', space=sflag, size = 0x8, scoped, tag = 'scoped memory for tpu_custom_call.1']
    #allocation7 [shape = 'u8[8192]{0}', space=vmem, size = 0x2000, scoped, tag = 'output window, operand 0']
    %15 = vsyncpa [#allocation5], 0
    %s16 = scalar_lea.sflag [#allocation5], 1
    %17 = vsyncpa %s16, 0
    %18 = vsyncpa [#allocation6], 0
    %s19 = scalar_lea.sflag [#allocation6], 1
    %20 = vsyncpa %s19, 0
    loop: start=0, step=1, limit=10
    $region2: #{tpu_custom_call.1} parent=1 // loop_pre_header
      _
    $region3: #{tpu_custom_call.1} parent=1 // loop_header
      %s22 = sphi 0, %s26
      %p23 = scmp.ge.s32.totalorder %s22, 10
      %s29 = sphi 0, %s55
      %s30 = sphi 0, %s51
      %s31 = sphi 0, %s47
      %s32 = sphi 0, %s43
      %s33 = sphi 0, %s29
      %s34 = sphi 0, %s30
      %s35 = sphi 0, %s31
      %s36 = sphi 0, %s32
      %s37 = sphi 0, %s33
      %s38 = sphi 0, %s34
      %s39 = sphi 0, %s35
      %s40 = sphi 0, %s36
      %s64 = sphi 0, %s66
      %s67 = sphi 0, %s64
      %s68 = sphi 0, %s67
      %s84 = sphi 0, %s68
      %s96 = sphi 0, %s98
      %s99 = sphi 0, %s96
      %s100 = sphi 0, %s99
      %s116 = sphi 0, %s100
    $region4: #{tpu_custom_call.1} parent=1 // loop_header_branch
      %25 = sbr.rel (%p23) target = $region8
    $region5: #{tpu_custom_call.1} parent=1 // loop_body
      %s27 = ssub.s32 %s22, 1
      %s28 = ssub.s32 %s22, 2
      %s41 = sadd.s32 1, %s32
      %p42 = scmp.ge.s32.totalorder %s41, 1
      %s43 = scalar_select %p42, 0, %s41
      %s44 = sadd.s32 1, %s31
      %s45 = scalar_select %p42, %s44, %s31
      %p46 = scmp.ge.s32.totalorder %s45, 1
      %s47 = scalar_select %p46, 0, %s45
      %s48 = sadd.s32 1, %s30
      %s49 = scalar_select %p46, %s48, %s30
      %p50 = scmp.ge.s32.totalorder %s49, 4
      %s51 = scalar_select %p50, 0, %s49
      %s52 = sadd.s32 1, %s29
      %s53 = scalar_select %p50, %s52, %s29
      %p54 = scmp.ge.s32.totalorder %s53, 2
      %s55 = scalar_select %p54, 0, %s53
      %s56 = ssub.s32 %s29, %s55
      %s57 = ssub.s32 %s30, %s51
      %s58 = sor.u32 %s56, %s57
      %s59 = ssub.s32 %s31, %s47
      %s60 = sor.u32 %s58, %s59
      %s61 = ssub.s32 %s32, %s43
      %s62 = sor.u32 %s60, %s61
      %p63 = scmp.eq.s32.totalorder %s62, 0
      %s65 = sadd.s32 %s64, 1
      %s66 = scalar_select %p63, %s64, %s65
      %p69 = pneg %p63
      %p70 = scmp.eq.s32.totalorder %s22, 7
      %p71 = por %p69, %p70
      %p72 = scmp.ne.s32.totalorder %s64, %s67
      %p73 = scmp.eq.s32.totalorder %s22, 0
      %p74 = por %p72, %p73
      %p75 = scmp.ne.s32.totalorder %s64, %s67
      %p76 = scmp.eq.s32.totalorder %s27, 7
      %p77 = por %p75, %p76
      %p78 = scmp.ne.s32.totalorder %s67, %s68
      %p79 = scmp.eq.s32.totalorder %s27, 0
      %p80 = por %p78, %p79
      %p81 = scmp.ne.s32.totalorder %s67, %s68
      %p82 = scmp.eq.s32.totalorder %s28, 7
      %p83 = por %p81, %p82
      %p85 = scmp.ne.s32.totalorder %s68, %s84
      %p86 = scmp.eq.s32.totalorder %s28, 0
      %p87 = por %p85, %p86
      %s88 = ssub.s32 %s29, %s55
      %s89 = ssub.s32 %s30, %s51
      %s90 = sor.u32 %s88, %s89
      %s91 = ssub.s32 %s31, %s47
      %s92 = sor.u32 %s90, %s91
      %s93 = ssub.s32 %s32, %s43
      %s94 = sor.u32 %s92, %s93
      %p95 = scmp.eq.s32.totalorder %s94, 0
      %s97 = sadd.s32 %s96, 1
      %s98 = scalar_select %p95, %s96, %s97
      %p101 = pneg %p95
      %p102 = scmp.eq.s32.totalorder %s22, 7
      %p103 = por %p101, %p102
      %p104 = scmp.ne.s32.totalorder %s96, %s99
      %p105 = scmp.eq.s32.totalorder %s22, 0
      %p106 = por %p104, %p105
      %p107 = scmp.ne.s32.totalorder %s96, %s99
      %p108 = scmp.eq.s32.totalorder %s27, 7
      %p109 = por %p107, %p108
      %p110 = scmp.ne.s32.totalorder %s99, %s100
      %p111 = scmp.eq.s32.totalorder %s27, 0
      %p112 = por %p110, %p111
      %p113 = scmp.ne.s32.totalorder %s99, %s100
      %p114 = scmp.eq.s32.totalorder %s28, 7
      %p115 = por %p113, %p114
      %p117 = scmp.ne.s32.totalorder %s100, %s116
      %p118 = scmp.eq.s32.totalorder %s28, 0
      %p119 = por %p117, %p118
      %p120 = scmp.le.s32.totalorder 1, %s22
      %p121 = scmp.lt.s32.totalorder %s22, 9
      %p122 = pnand %p120, %p121
      %p123 = pneg %p122
      // Predicated region
      $region9: #{tpu_custom_call.1} parent=5 // pred_check
        _
      $region10: #{tpu_custom_call.1} parent=5 // pred_check_branch
        %125 = sbr.rel (%p122) target = $region12
      $region11: #{tpu_custom_call.1} parent=5 // pred_region
        %s126 = ssub.s32 %s22, 1
      $region12: #{tpu_custom_call.1} parent=5 // pred_fallthru
        _
      %p127 = scmp.lt.s32.totalorder %s22, 8
      // Predicated region
      $region13: #{tpu_custom_call.1} parent=5 // pred_check
        %p128 = pneg %p127
      $region14: #{tpu_custom_call.1} parent=5 // pred_check_branch
        %130 = sbr.rel (%p128) target = $region16
      $region15: #{tpu_custom_call.1} parent=5 // pred_region
        // Predicated region
        $region17: #{tpu_custom_call.1} parent=15 // pred_check
          %p131 = pneg %p74
        $region18: #{tpu_custom_call.1} parent=15 // pred_check_branch
          %133 = sbr.rel (%p131) target = $region20
        $region19: #{tpu_custom_call.1} parent=15 // pred_region
          %s134 = sand.u32 %s64, 1
          %s135 = scalar_lea.sflag [#allocation5], %s134
          %s136 = sand.u32 %s64, 1
          %s137 = smul.addr %s136, 8
          %s138 = scalar_lea.vmem [#allocation4], %s137
          %140 = vsyncadd %s135, 0
          %s141 = sadd.s32 %s32, %s31
          %s142 = sadd.s32 %s141, %s30
          %s143 = smul.addr %s29, 4
          %s144 = sadd.s32 %s142, %s143
          %s145 = smul.addr %s144, 8
          %s146 = scalar_lea.hbm %s1, %s145
          %s148 = sshll.u32 %s146, 4
          %s149 = int_to_ptr.hbm [resolvable:$true] %s148
          %s150 = sshll.u32 %s138, 4
          %s151 = int_to_ptr.vmem [resolvable:$true] %s150
          %153 = dma.hbm_to_vmem [thread:$0]  %s149, 128, %s151, %s135
        $region20: #{tpu_custom_call.1} parent=15 // pred_fallthru
          _
      $region16: #{tpu_custom_call.1} parent=5 // pred_fallthru
        _
      %p154 = scmp.le.s32.totalorder 1, %s22
      %p155 = scmp.lt.s32.totalorder %s22, 9
      %p156 = pnand %p154, %p155
      %p157 = pneg %p156
      // Predicated region
      $region21: #{tpu_custom_call.1} parent=5 // pred_check
        _
      $region22: #{tpu_custom_call.1} parent=5 // pred_check_branch
        %159 = sbr.rel (%p156) target = $region24
      $region23: #{tpu_custom_call.1} parent=5 // pred_region
        %s160 = ssub.s32 %s22, 1
        %s161 = sand.u32 %s67, 1
        %s162 = scalar_lea.sflag [#allocation5], %s161
        %s163 = sand.u32 %s67, 1
        %s164 = smul.addr %s163, 8
        %s165 = scalar_lea.vmem [#allocation4], %s164
        // Predicated region
        $region25: #{tpu_custom_call.1} parent=23 // pred_check
          %p166 = pneg %p80
        $region26: #{tpu_custom_call.1} parent=23 // pred_check_branch
          %168 = sbr.rel (%p166) target = $region28
        $region27: #{tpu_custom_call.1} parent=23 // pred_region
          %170 = dma.done %s162, 128
        $region28: #{tpu_custom_call.1} parent=23 // pred_fallthru
          _
        %s171 = sand.u32 %s67, 1
        %s172 = scalar_lea.sflag [#allocation5], %s171
        %s173 = sand.u32 %s67, 1
        %s174 = smul.addr %s173, 8
        %s175 = scalar_lea.vmem [#allocation4], %s174
        %p176 = pneg %p80
        %p177 = pneg %p77
        %p178 = pneg %p112
        %p179 = pneg %p109
        %s180 = sand.u32 %s99, 1
        %s181 = scalar_lea.sflag [#allocation6], %s180
        %s182 = sand.u32 %s99, 1
        %s183 = smul.addr %s182, 8
        %s184 = scalar_lea.vmem [#allocation7], %s183
        %v185 = vlaneseq
        %v186 = vshrl.u32 %v185, 7
        %s187 = smul.u32 %s35, 8
        %v188 = vstv %s187
        %v189 = vadd.s32 %v186, %v188
        %v190 = vadd.s32 %v189, 120
        %v191 = vlaneseq
        %v192 = vand.u32 %v191, 127
        %s193 = smul.u32 %s36, 128
        %v194 = vstv %s193
        %v195 = vadd.s32 %v192, %v194
        %v196 = vsub.s32 %v195, %v190
        %vm197 = vcmp.lt.s32.totalorder %v196, 0
        %v198 = vsub.s32 0, %v196
        %v199 = vsel %vm197, %v198, %v196
        %v200 = vcvt.s32.f32 %v199
        %v201 = vsub.f32 0.0, %v200
        %s202 = sld [smem:[#allocation3 + %s34]]
        %v203 = vld [vmem:[%s165] sm:$0xff]
        %v204 = vstv %s202
        %v205 = vmul.f32 %v201, %v204
        %v206 = vadd.f32 %v203, %v205
        %207 = vst [vmem:[%s184] sm:$0xff] %v206
        %s208 = sand.u32 %s99, 1
        %s209 = scalar_lea.sflag [#allocation6], %s208
        %s210 = sand.u32 %s99, 1
        %s211 = smul.addr %s210, 8
        %s212 = scalar_lea.vmem [#allocation7], %s211
        // Predicated region
        $region29: #{tpu_custom_call.1} parent=23 // pred_check
          %p213 = pneg %p109
        $region30: #{tpu_custom_call.1} parent=23 // pred_check_branch
          %215 = sbr.rel (%p213) target = $region32
        $region31: #{tpu_custom_call.1} parent=23 // pred_region
          %217 = vsyncadd %s209, 0
          %s218 = sadd.s32 %s36, %s35
          %s219 = sadd.s32 %s218, %s34
          %s220 = smul.addr %s33, 4
          %s221 = sadd.s32 %s219, %s220
          %s222 = smul.addr %s221, 8
          %s223 = scalar_lea.hbm %s2, %s222
          %s225 = sshll.u32 %s212, 4
          %s226 = int_to_ptr.vmem [resolvable:$true] %s225
          %s227 = sshll.u32 %s223, 4
          %s228 = int_to_ptr.hbm [resolvable:$true] %s227
          %230 = dma.vmem_to_hbm [thread:$0]  %s226, 128, %s228, %s209
        $region32: #{tpu_custom_call.1} parent=23 // pred_fallthru
          _
      $region24: #{tpu_custom_call.1} parent=5 // pred_fallthru
        _
      %p231 = scmp.le.s32.totalorder 2, %s22
      // Predicated region
      $region33: #{tpu_custom_call.1} parent=5 // pred_check
        %p232 = pneg %p231
      $region34: #{tpu_custom_call.1} parent=5 // pred_check_branch
        %234 = sbr.rel (%p232) target = $region36
      $region35: #{tpu_custom_call.1} parent=5 // pred_region
        %s235 = ssub.s32 %s22, 2
        // Predicated region
        $region37: #{tpu_custom_call.1} parent=35 // pred_check
          %p236 = pneg %p115
        $region38: #{tpu_custom_call.1} parent=35 // pred_check_branch
          %238 = sbr.rel (%p236) target = $region40
        $region39: #{tpu_custom_call.1} parent=35 // pred_region
          %s239 = sand.u32 %s100, 1
          %s240 = scalar_lea.sflag [#allocation6], %s239
          %s241 = sand.u32 %s100, 1
          %s242 = smul.addr %s241, 8
          %s243 = scalar_lea.vmem [#allocation7], %s242
          %245 = dma.done %s240, 128
        $region40: #{tpu_custom_call.1} parent=35 // pred_fallthru
          _
      $region36: #{tpu_custom_call.1} parent=5 // pred_fallthru
        _
    $region6: #{tpu_custom_call.1} parent=1 // loop_footer
      %s26 = sadd.s32 1, %s22
    $region7: #{tpu_custom_call.1} parent=1 // loop_footer_branch
      %21 = sbr.rel target = $region3
    $region8: #{tpu_custom_call.1} parent=1 // loop_exit
      _
    %246 = vsyncpa [#allocation5], 1
    %s247 = scalar_lea.sflag [#allocation5], 1
    %248 = vsyncpa %s247, 1
    %249 = vsyncpa [#allocation6], 1
    %s250 = scalar_lea.sflag [#allocation6], 1
    %251 = vsyncpa %s250, 1

</llo_original>
